<compile_context>
chip_gen: v6e
topology: v6e:2x2x1
jax: 0.10.0
libtpu: 0.0.40
codegen_flags: <defaults>
</compile_context>

<pallas_src>
import functools

import jax
import jax.numpy as jnp
from jax.experimental import pallas as pl
from jax.experimental.pallas import tpu as pltpu


def _round_up(n: int, m: int) -> int:
    return ((n + m - 1) // m) * m


def mlp_kernel(xt_ref, w1_ref, b1_ref, w2_ref, b2_ref, w3_ref, b3_ref, o_ref,
               *, mxu_dtype):
    # xt_ref:  (K0, TB)  input tile, batch on the lane axis
    # w1_ref:  (H1, K0)  b1_ref: (H1, 1)
    # w2_ref:  (H2, H1)  b2_ref: (H2, 1)
    # w3_ref:  (H2, 1)   b3_ref: (1, 1) scalar in SMEM
    # o_ref:   (1, TB)   lane-dense output tile
    xt = xt_ref[...]
    h1 = jnp.dot(w1_ref[...].astype(mxu_dtype), xt.astype(mxu_dtype),
                 preferred_element_type=jnp.float32) + b1_ref[...]
    h1 = jnp.maximum(h1, 0.0)
    h2 = jnp.dot(w2_ref[...].astype(mxu_dtype), h1.astype(mxu_dtype),
                 preferred_element_type=jnp.float32) + b2_ref[...]
    h2 = jnp.maximum(h2, 0.0)
    # Final 64 -> 1 projection: VPU multiply + sublane (XLU) reduction, not an
    # N=1 matmul.  Bias comes from SMEM as a true scalar.
    out = jnp.sum(h2 * w3_ref[...], axis=0, keepdims=True) + b3_ref[0, 0]
    o_ref[...] = out.astype(o_ref.dtype)


def mymodel_forward(x, params, *, batch_tile=None, mxu_dtype=jnp.float32):
    """x: (B, input_dim) float32. Returns (B, 1) like the PyTorch module."""
    B, K0 = x.shape
    w1, b1, w2, b2, w3, b3 = (params["w1"], params["b1"], params["w2"],
                              params["b2"], params["w3"], params["b3"])

    # Lane-aligned batch tile (multiple of 128); cap at 512 so the per-step VMEM
    # footprint stays tiny even on v7x's 64 MiB VMEM.
    if batch_tile is None:
        batch_tile = 512 if B >= 512 else _round_up(B, 128)
    tb = batch_tile
    b_pad = _round_up(B, tb)

    # Put batch on the lane axis: x_t is (input_dim, B_pad).  Padded columns are
    # zeros and get sliced off afterwards.
    x_t = x.T
    if b_pad != B:
        x_t = jnp.pad(x_t, ((0, 0), (0, b_pad - B)))

    grid = (b_pad // tb,)

    def resident(a):
        # Block == full array, always block index (0, 0): loaded once, stays in VMEM.
        return pl.BlockSpec(a.shape, lambda i: (0,) * a.ndim)

    out_t = pl.pallas_call(
        functools.partial(mlp_kernel, mxu_dtype=mxu_dtype),
        out_shape=jax.ShapeDtypeStruct((1, b_pad), x.dtype),
        grid=grid,
        in_specs=[
            pl.BlockSpec((K0, tb), lambda i: (0, i)),           # x tile (batch on lanes)
            resident(w1), resident(b1),
            resident(w2), resident(b2),
            resident(w3),
            pl.BlockSpec((1, 1), lambda i: (0, 0),
                         memory_space=pltpu.MemorySpace.SMEM),  # scalar b3
        ],
        out_specs=pl.BlockSpec((1, tb), lambda i: (0, i)),      # lane-dense output
        compiler_params=pltpu.CompilerParams(
            dimension_semantics=("parallel",)),
    )(x_t, w1, b1, w2, b2, w3, b3)

    # (1, B_pad) -> (B, 1)
    return out_t[0, :B][:, None]


def init_params(key, input_dim):
    # PyTorch nn.Linear layout: weight (out_features, in_features); uniform init.
    k1, k2, k3, k4, k5, k6 = jax.random.split(key, 6)

    def u(k, shape, fan_in):
        bound = 1.0 / jnp.sqrt(fan_in)
        return jax.random.uniform(k, shape, jnp.float32, -bound, bound)

    return {
        "w1": u(k1, (128, input_dim), input_dim),
        "b1": u(k2, (128, 1), input_dim),
        "w2": u(k3, (64, 128), 128),
        "b2": u(k4, (64, 1), 128),
        "w3": u(k5, (64, 1), 64),
        "b3": u(k6, (1, 1), 64),
    }


if __name__ == "__main__":
    key = jax.random.PRNGKey(0)
    kx, kp = jax.random.split(key)

    batch, input_dim = 8, 32
    x = jax.random.normal(kx, (batch, input_dim), jnp.float32)
    params = init_params(kp, input_dim)

    out = mymodel_forward(x, params)
    jax.block_until_ready(out)

    # Reference (plain JAX, PyTorch semantics: y = x @ W.T + b).
    h1 = jnp.maximum(x @ params["w1"].T + params["b1"][:, 0], 0.0)
    h2 = jnp.maximum(h1 @ params["w2"].T + params["b2"][:, 0], 0.0)
    ref = h2 @ params["w3"] + params["b3"][0, 0]

    assert out.shape == (batch, 1), out.shape
    assert jnp.allclose(out, ref, atol=2e-5, rtol=2e-5), float(
        jnp.max(jnp.abs(out - ref)))

    print("KERNEL_OK")
</pallas_src>

<mosaic_0001>
module attributes {stable_mosaic.version = 11 : i64} {
  func.func @mlp_kernel(%arg0: i32, %arg1: memref<32x128xf32, #tpu.memory_space<vmem>>, %arg2: memref<128x32xf32, #tpu.memory_space<vmem>>, %arg3: memref<128x1xf32, #tpu.memory_space<vmem>>, %arg4: memref<64x128xf32, #tpu.memory_space<vmem>>, %arg5: memref<64x1xf32, #tpu.memory_space<vmem>>, %arg6: memref<64x1xf32, #tpu.memory_space<vmem>>, %arg7: memref<1x1xf32, #tpu.memory_space<smem>>, %arg8: memref<1x128xf32, #tpu.memory_space<vmem>>) attributes {dimension_semantics = [#tpu.dimension_semantics<parallel>], iteration_bounds = array<i64: 1>, scalar_prefetch = 0 : i64, scratch_operands = 0 : i64, tpu.core_type = #tpu.core_type<tc>, window_params = [{transform_indices = @transform_0, window_bounds = array<i64: 32, 128>}, {pipeline_mode = #tpu.pipeline_mode<synchronous>, transform_indices = @transform_1, window_bounds = array<i64: 128, 32>}, {pipeline_mode = #tpu.pipeline_mode<synchronous>, transform_indices = @transform_2, window_bounds = array<i64: 128, 1>}, {pipeline_mode = #tpu.pipeline_mode<synchronous>, transform_indices = @transform_3, window_bounds = array<i64: 64, 128>}, {pipeline_mode = #tpu.pipeline_mode<synchronous>, transform_indices = @transform_4, window_bounds = array<i64: 64, 1>}, {pipeline_mode = #tpu.pipeline_mode<synchronous>, transform_indices = @transform_5, window_bounds = array<i64: 64, 1>}, {transform_indices = @transform_6, window_bounds = array<i64: 1, 1>}, {transform_indices = @transform_7, window_bounds = array<i64: 1, 128>}]} {
    %c0 = arith.constant 0 : index
    %c0_0 = arith.constant 0 : index
    %0 = vector.load %arg1[%c0, %c0_0] : memref<32x128xf32, #tpu.memory_space<vmem>>, vector<32x128xf32>
    %c0_1 = arith.constant 0 : index
    %c0_2 = arith.constant 0 : index
    %1 = vector.load %arg2[%c0_1, %c0_2] : memref<128x32xf32, #tpu.memory_space<vmem>>, vector<128x32xf32>
    %cst = arith.constant dense<0.000000e+00> : vector<128x128xf32>
    %2 = tpu.matmul %1, %0, %cst {dimension_numbers = #tpu.dot_dimension_numbers<[1], [0], [0], [1], [0, 0, 1, 1], [], []>} : vector<128x32xf32>, vector<32x128xf32>, vector<128x128xf32> -> vector<128x128xf32>
    %c0_3 = arith.constant 0 : index
    %c0_4 = arith.constant 0 : index
    %3 = vector.load %arg3[%c0_3, %c0_4] : memref<128x1xf32, #tpu.memory_space<vmem>>, vector<128x1xf32>
    %4 = vector.broadcast %3 : vector<128x1xf32> to vector<128x128xf32>
    %5 = arith.addf %2, %4 : vector<128x128xf32>
    %cst_5 = arith.constant 0.000000e+00 : f32
    %6 = vector.broadcast %cst_5 : f32 to vector<128x128xf32>
    %7 = arith.maximumf %5, %6 : vector<128x128xf32>
    %c0_6 = arith.constant 0 : index
    %c0_7 = arith.constant 0 : index
    %8 = vector.load %arg4[%c0_6, %c0_7] : memref<64x128xf32, #tpu.memory_space<vmem>>, vector<64x128xf32>
    %cst_8 = arith.constant dense<0.000000e+00> : vector<64x128xf32>
    %9 = tpu.matmul %8, %7, %cst_8 {dimension_numbers = #tpu.dot_dimension_numbers<[1], [0], [0], [1], [0, 0, 1, 1], [], []>} : vector<64x128xf32>, vector<128x128xf32>, vector<64x128xf32> -> vector<64x128xf32>
    %c0_9 = arith.constant 0 : index
    %c0_10 = arith.constant 0 : index
    %10 = vector.load %arg5[%c0_9, %c0_10] : memref<64x1xf32, #tpu.memory_space<vmem>>, vector<64x1xf32>
    %11 = vector.broadcast %10 : vector<64x1xf32> to vector<64x128xf32>
    %12 = arith.addf %9, %11 : vector<64x128xf32>
    %cst_11 = arith.constant 0.000000e+00 : f32
    %13 = vector.broadcast %cst_11 : f32 to vector<64x128xf32>
    %14 = arith.maximumf %12, %13 : vector<64x128xf32>
    %c0_12 = arith.constant 0 : index
    %c0_13 = arith.constant 0 : index
    %15 = vector.load %arg6[%c0_12, %c0_13] : memref<64x1xf32, #tpu.memory_space<vmem>>, vector<64x1xf32>
    %16 = vector.broadcast %15 : vector<64x1xf32> to vector<64x128xf32>
    %17 = arith.mulf %14, %16 : vector<64x128xf32>
    %cst_14 = arith.constant dense<0.000000e+00> : vector<128xf32>
    %18 = vector.multi_reduction <add>, %17, %cst_14 [0] : vector<64x128xf32> to vector<128xf32>
    %19 = vector.shape_cast %18 : vector<128xf32> to vector<1x128xf32>
    %c0_15 = arith.constant 0 : index
    %c0_16 = arith.constant 0 : index
    %20 = memref.load %arg7[%c0_15, %c0_16] : memref<1x1xf32, #tpu.memory_space<smem>>
    %21 = vector.broadcast %20 : f32 to vector<1x128xf32>
    %22 = arith.addf %19, %21 : vector<1x128xf32>
    %c0_17 = arith.constant 0 : index
    %c0_18 = arith.constant 0 : index
    %23 = vector.load %arg8[%c0_17, %c0_18] : memref<1x128xf32, #tpu.memory_space<vmem>>, vector<1x128xf32>
    tpu.vector_store %arg8[%c0_17, %c0_18], %22 {strides = array<i32>} : memref<1x128xf32, #tpu.memory_space<vmem>>, vector<1x128xf32>,
    return
  }
  func.func @transform_0(%arg0: i32) -> (i32, i32) {
    %c0_i32 = arith.constant 0 : i32
    %c0_i32_0 = arith.constant 0 : i32
    return %c0_i32, %arg0 : i32, i32
  }
  func.func @transform_1(%arg0: i32) -> (i32, i32) {
    %c0_i32 = arith.constant 0 : i32
    %c0_i32_0 = arith.constant 0 : i32
    %c0_i32_1 = arith.constant 0 : i32
    return %c0_i32, %c0_i32_0 : i32, i32
  }
  func.func @transform_2(%arg0: i32) -> (i32, i32) {
    %c0_i32 = arith.constant 0 : i32
    %c0_i32_0 = arith.constant 0 : i32
    %c0_i32_1 = arith.constant 0 : i32
    return %c0_i32, %c0_i32_0 : i32, i32
  }
  func.func @transform_3(%arg0: i32) -> (i32, i32) {
    %c0_i32 = arith.constant 0 : i32
    %c0_i32_0 = arith.constant 0 : i32
    %c0_i32_1 = arith.constant 0 : i32
    return %c0_i32, %c0_i32_0 : i32, i32
  }
  func.func @transform_4(%arg0: i32) -> (i32, i32) {
    %c0_i32 = arith.constant 0 : i32
    %c0_i32_0 = arith.constant 0 : i32
    %c0_i32_1 = arith.constant 0 : i32
    return %c0_i32, %c0_i32_0 : i32, i32
  }
  func.func @transform_5(%arg0: i32) -> (i32, i32) {
    %c0_i32 = arith.constant 0 : i32
    %c0_i32_0 = arith.constant 0 : i32
    %c0_i32_1 = arith.constant 0 : i32
    return %c0_i32, %c0_i32_0 : i32, i32
  }
  func.func @transform_6(%arg0: i32) -> (i32, i32) {
    %c0_i32 = arith.constant 0 : i32
    %c0_i32_0 = arith.constant 0 : i32
    %c0_i32_1 = arith.constant 0 : i32
    return %c0_i32, %c0_i32_0 : i32, i32
  }
  func.func @transform_7(%arg0: i32) -> (i32, i32) {
    %c0_i32 = arith.constant 0 : i32
    %c0_i32_0 = arith.constant 0 : i32
    return %c0_i32, %arg0 : i32, i32
  }
}

</mosaic_0001>

<llo_original>
// kernel: tpu_custom_call.1
$region0: #{tpu_custom_call.1}
  #allocation0 [shape = 'u32[]', space=smem, size = 0x4, offset = 0x4, fixed_abs, tag = 'smem constant byte address 0x4 - core index']
  #allocation1 [shape = 'u32[144,128]{1,0:T(1,128)}', space=vmem, size = 0x12000, scoped, tag = 'internal scratch']
  #allocation2 [shape = 'f32[1,1]{1,0:T(1,128)S(6)}', space=smem, size = 0x200, scoped, tag = 'scoped memory for tpu_custom_call.1']
  %s0 = inlined_call_operand.vmem [shape: f32[32,128], index: 0, kind: input, shape index: {}]
  %s1 = inlined_call_operand.vmem [shape: f32[128,32], index: 1, kind: input, shape index: {}]
  %s2 = inlined_call_operand.vmem [shape: f32[128,1], index: 2, kind: input, shape index: {}]
  %s3 = inlined_call_operand.vmem [shape: f32[64,128], index: 3, kind: input, shape index: {}]
  %s4 = inlined_call_operand.vmem [shape: f32[64,1], index: 4, kind: input, shape index: {}]
  %s5 = inlined_call_operand.vmem [shape: f32[64,1], index: 5, kind: input, shape index: {}]
  %s6 = inlined_call_operand.<no memory space> [shape: f32[1,1], index: 6, kind: input, shape index: {}]
  %s7 = inlined_call_operand.hbm [shape: f32[1,128], index: 7, kind: output, shape index: {}]
  %s8 = sld [smem:[#allocation0]]
  $region38: #{tpu_custom_call.1} parent=0
    _
  %s10 = ssub.s32 1, %s8
  %s11 = scalar_select 0, %s10, %s8
  %12 = sst [smem:[#allocation2]] %s6
  $region1: #{tpu_custom_call.1} parent=0
    #allocation3 [shape = 'u8[512]{0}', space=vmem, size = 0x400, scoped, tag = 'output window, operand 0, single buffered']
    #allocation4 [shape = 's32[1]{0}', space=sflag, size = 0x4, scoped, tag = 'scoped memory for tpu_custom_call.1']
    %13 = vsyncpa [#allocation4], 0
    // Predicated region
    $region2: #{tpu_custom_call.1} parent=1 // pred_check
      _
    $region3: #{tpu_custom_call.1} parent=1 // pred_check_branch
      %15 = sbr.rel (0) target = $region5
    $region4: #{tpu_custom_call.1} parent=1 // pred_region
      _
    $region5: #{tpu_custom_call.1} parent=1 // pred_fallthru
      _
    // Predicated region
    $region6: #{tpu_custom_call.1} parent=1 // pred_check
      _
    $region7: #{tpu_custom_call.1} parent=1 // pred_check_branch
      %17 = sbr.rel (0) target = $region9
    $region8: #{tpu_custom_call.1} parent=1 // pred_region
      _
    $region9: #{tpu_custom_call.1} parent=1 // pred_fallthru
      _
    // Predicated region
    $region10: #{tpu_custom_call.1} parent=1 // pred_check
      _
    $region11: #{tpu_custom_call.1} parent=1 // pred_check_branch
      %19 = sbr.rel (0) target = $region13
    $region12: #{tpu_custom_call.1} parent=1 // pred_region
      _
    $region13: #{tpu_custom_call.1} parent=1 // pred_fallthru
      _
    // Predicated region
    $region14: #{tpu_custom_call.1} parent=1 // pred_check
      _
    $region15: #{tpu_custom_call.1} parent=1 // pred_check_branch
      %21 = sbr.rel (0) target = $region17
    $region16: #{tpu_custom_call.1} parent=1 // pred_region
      _
    $region17: #{tpu_custom_call.1} parent=1 // pred_fallthru
      _
    // Predicated region
    $region18: #{tpu_custom_call.1} parent=1 // pred_check
      _
    $region19: #{tpu_custom_call.1} parent=1 // pred_check_branch
      %23 = sbr.rel (0) target = $region21
    $region20: #{tpu_custom_call.1} parent=1 // pred_region
      _
    $region21: #{tpu_custom_call.1} parent=1 // pred_fallthru
      _
    // Predicated region
    $region22: #{tpu_custom_call.1} parent=1 // pred_check
      _
    $region23: #{tpu_custom_call.1} parent=1 // pred_check_branch
      %25 = sbr.rel (0) target = $region25
    $region24: #{tpu_custom_call.1} parent=1 // pred_region
      _
    $region25: #{tpu_custom_call.1} parent=1 // pred_fallthru
      _
    // Predicated region
    $region26: #{tpu_custom_call.1} parent=1 // pred_check
      _
    $region27: #{tpu_custom_call.1} parent=1 // pred_check_branch
      %27 = sbr.rel (0) target = $region29
    $region28: #{tpu_custom_call.1} parent=1 // pred_region
      _
    $region29: #{tpu_custom_call.1} parent=1 // pred_fallthru
      _
    %v28 = vld [vmem:[%s0] sm:$0xff]
    %v29 = vld [vmem:[%s0 + $0x8] sm:$0xff]
    %v30 = vld [vmem:[%s0 + $0x10] sm:$0xff]
    %v31 = vld [vmem:[%s0 + $0x18] sm:$0xff]
    %v32 = vld [vmem:[%s1] sm:$0xff]
    %v33 = vld [vmem:[%s1 + $0x8] sm:$0xff]
    %v34 = vld [vmem:[%s1 + $0x10] sm:$0xff]
    %v35 = vld [vmem:[%s1 + $0x18] sm:$0xff]
    %v36 = vld [vmem:[%s1 + $0x20] sm:$0xff]
    %v37 = vld [vmem:[%s1 + $0x28] sm:$0xff]
    %v38 = vld [vmem:[%s1 + $0x30] sm:$0xff]
    %v39 = vld [vmem:[%s1 + $0x38] sm:$0xff]
    %v40 = vld [vmem:[%s1 + $0x40] sm:$0xff]
    %v41 = vld [vmem:[%s1 + $0x48] sm:$0xff]
    %v42 = vld [vmem:[%s1 + $0x50] sm:$0xff]
    %v43 = vld [vmem:[%s1 + $0x58] sm:$0xff]
    %v44 = vld [vmem:[%s1 + $0x60] sm:$0xff]
    %v45 = vld [vmem:[%s1 + $0x68] sm:$0xff]
    %v46 = vld [vmem:[%s1 + $0x70] sm:$0xff]
    %v47 = vld [vmem:[%s1 + $0x78] sm:$0xff]
    %v48 = vld [vmem:[%s2] sm:$0xff]
    %v49 = vld [vmem:[%s2 + $0x8] sm:$0xff]
    %v50 = vld [vmem:[%s2 + $0x10] sm:$0xff]
    %v51 = vld [vmem:[%s2 + $0x18] sm:$0xff]
    %v52 = vld [vmem:[%s2 + $0x20] sm:$0xff]
    %v53 = vld [vmem:[%s2 + $0x28] sm:$0xff]
    %v54 = vld [vmem:[%s2 + $0x30] sm:$0xff]
    %v55 = vld [vmem:[%s2 + $0x38] sm:$0xff]
    %v56 = vld [vmem:[%s2 + $0x40] sm:$0xff]
    %v57 = vld [vmem:[%s2 + $0x48] sm:$0xff]
    %v58 = vld [vmem:[%s2 + $0x50] sm:$0xff]
    %v59 = vld [vmem:[%s2 + $0x58] sm:$0xff]
    %v60 = vld [vmem:[%s2 + $0x60] sm:$0xff]
    %v61 = vld [vmem:[%s2 + $0x68] sm:$0xff]
    %v62 = vld [vmem:[%s2 + $0x70] sm:$0xff]
    %v63 = vld [vmem:[%s2 + $0x78] sm:$0xff]
    %65 = vset.pattern.permute.xlu0 0
    %66 = vperm.xlu0 %65, %v48
    %v67 = vpop.permute.xlu0 %66
    %70 = vset.pattern.permute.xlu0 0
    %71 = vperm.xlu0 %70, %v49
    %v72 = vpop.permute.xlu0 %71
    %75 = vset.pattern.permute.xlu0 0
    %76 = vperm.xlu0 %75, %v50
    %v77 = vpop.permute.xlu0 %76
    %80 = vset.pattern.permute.xlu0 0
    %81 = vperm.xlu0 %80, %v51
    %v82 = vpop.permute.xlu0 %81
    %85 = vset.pattern.permute.xlu0 0
    %86 = vperm.xlu0 %85, %v52
    %v87 = vpop.permute.xlu0 %86
    %90 = vset.pattern.permute.xlu0 0
    %91 = vperm.xlu0 %90, %v53
    %v92 = vpop.permute.xlu0 %91
    %95 = vset.pattern.permute.xlu0 0
    %96 = vperm.xlu0 %95, %v54
    %v97 = vpop.permute.xlu0 %96
    %100 = vset.pattern.permute.xlu0 0
    %101 = vperm.xlu0 %100, %v55
    %v102 = vpop.permute.xlu0 %101
    %105 = vset.pattern.permute.xlu0 0
    %106 = vperm.xlu0 %105, %v56
    %v107 = vpop.permute.xlu0 %106
    %110 = vset.pattern.permute.xlu0 0
    %111 = vperm.xlu0 %110, %v57
    %v112 = vpop.permute.xlu0 %111
    %115 = vset.pattern.permute.xlu0 0
    %116 = vperm.xlu0 %115, %v58
    %v117 = vpop.permute.xlu0 %116
    %120 = vset.pattern.permute.xlu0 0
    %121 = vperm.xlu0 %120, %v59
    %v122 = vpop.permute.xlu0 %121
    %125 = vset.pattern.permute.xlu0 0
    %126 = vperm.xlu0 %125, %v60
    %v127 = vpop.permute.xlu0 %126
    %130 = vset.pattern.permute.xlu0 0
    %131 = vperm.xlu0 %130, %v61
    %v132 = vpop.permute.xlu0 %131
    %135 = vset.pattern.permute.xlu0 0
    %136 = vperm.xlu0 %135, %v62
    %v137 = vpop.permute.xlu0 %136
    %140 = vset.pattern.permute.xlu0 0
    %141 = vperm.xlu0 %140, %v63
    %v142 = vpop.permute.xlu0 %141
    %vm144 = vcmask 261120
    %v146 = vsel %vm144, %v32, 0
    %v149 = vsel %vm144, %v33, 0
    %v152 = vsel %vm144, %v34, 0
    %v155 = vsel %vm144, %v35, 0
    %v158 = vsel %vm144, %v36, 0
    %v161 = vsel %vm144, %v37, 0
    %v164 = vsel %vm144, %v38, 0
    %v167 = vsel %vm144, %v39, 0
    %v170 = vsel %vm144, %v40, 0
    %v173 = vsel %vm144, %v41, 0
    %v176 = vsel %vm144, %v42, 0
    %v179 = vsel %vm144, %v43, 0
    %v182 = vsel %vm144, %v44, 0
    %v185 = vsel %vm144, %v45, 0
    %v188 = vsel %vm144, %v46, 0
    %v191 = vsel %vm144, %v47, 0
    %193 = vmatprep.subr.mxu0 0.0
    %194 = vmatpush1.msra.mxu0 0.0
    %195 = vmatprep.subr.mxu0 0.0
    %196 = vmatpush1.msra.mxu0 0.0
    %197 = vmatprep.subr.mxu0 0.0
    %198 = vmatpush1.msra.mxu0 0.0
    %199 = vmatprep.subr.mxu0 0.0
    %200 = vmatpush1.msra.mxu0 0.0
    %201 = vmatprep.subr.mxu0 0.0
    %202 = vmatpush1.msra.mxu0 0.0
    %203 = vmatprep.subr.mxu0 0.0
    %204 = vmatpush1.msra.mxu0 0.0
    %205 = vmatprep.subr.mxu0 0.0
    %206 = vmatpush1.msra.mxu0 0.0
    %207 = vmatprep.subr.mxu0 0.0
    %208 = vmatpush1.msra.mxu0 0.0
    %209 = vmatprep.subr.mxu0 0.0
    %210 = vmatpush1.msra.mxu0 0.0
    %211 = vmatprep.subr.mxu0 0.0
    %212 = vmatpush1.msra.mxu0 0.0
    %213 = vmatprep.subr.mxu0 0.0
    %214 = vmatpush1.msra.mxu0 0.0
    %215 = vmatprep.subr.mxu0 0.0
    %216 = vmatpush1.msra.mxu0 0.0
    %217 = vmatprep.subr.mxu0 0.0
    %218 = vmatpush1.msra.mxu0 %v31
    %219 = vmatprep.subr.mxu0 0.0
    %220 = vmatpush1.msra.mxu0 %v30
    %221 = vmatprep.subr.mxu0 0.0
    %222 = vmatpush1.msra.mxu0 %v29
    %223 = vmatprep.subr.mxu0 0.0
    %224 = vmatpush1.msra.mxu0 %v28
    %225 = vmatprep.subr.mxu0 0.0
    %226 = vmatpush2.msra.mxu0 0.0
    %227 = vmatprep.subr.mxu0 0.0
    %228 = vmatpush2.msra.mxu0 0.0
    %229 = vmatprep.subr.mxu0 0.0
    %230 = vmatpush2.msra.mxu0 0.0
    %231 = vmatprep.subr.mxu0 0.0
    %232 = vmatpush2.msra.mxu0 0.0
    %233 = vmatprep.subr.mxu0 0.0
    %234 = vmatpush2.msra.mxu0 0.0
    %235 = vmatprep.subr.mxu0 0.0
    %236 = vmatpush2.msra.mxu0 0.0
    %237 = vmatprep.subr.mxu0 0.0
    %238 = vmatpush2.msra.mxu0 0.0
    %239 = vmatprep.subr.mxu0 0.0
    %240 = vmatpush2.msra.mxu0 0.0
    %241 = vmatprep.subr.mxu0 0.0
    %242 = vmatpush2.msra.mxu0 0.0
    %243 = vmatprep.subr.mxu0 0.0
    %244 = vmatpush2.msra.mxu0 0.0
    %245 = vmatprep.subr.mxu0 0.0
    %246 = vmatpush2.msra.mxu0 0.0
    %247 = vmatprep.subr.mxu0 0.0
    %248 = vmatpush2.msra.mxu0 0.0
    %249 = vmatprep.subr.mxu0 0.0
    %250 = vmatpush2.msra.mxu0 0.0
    %251 = vmatprep.subr.mxu0 0.0
    %252 = vmatpush2.msra.mxu0 0.0
    %253 = vmatprep.subr.mxu0 0.0
    %254 = vmatpush2.msra.mxu0 0.0
    %255 = vmatprep.subr.mxu0 0.0
    %256 = vmatpush2.msra.mxu0 0.0
    %257 = vmatprep.mubr.f32.mxu0 0.0
    %258 = vmatmul.mubr.f32.gmra.mxu0 %v146
    %v259 = vpop.f32.mrf.mxu0
    %v260 = vadd.f32 %v67, %v259
    %v261 = vpop.f32.mrf.mxu0
    %262 = vmatprep.mubr.f32.mxu0 0.0
    %263 = vmatmul.mubr.f32.gmra.mxu0 %v149
    %v264 = vpop.f32.mrf.mxu0
    %v265 = vadd.f32 %v72, %v264
    %v266 = vpop.f32.mrf.mxu0
    %267 = vmatprep.mubr.f32.mxu0 0.0
    %268 = vmatmul.mubr.f32.gmra.mxu0 %v152
    %v269 = vpop.f32.mrf.mxu0
    %v270 = vadd.f32 %v77, %v269
    %v271 = vpop.f32.mrf.mxu0
    %272 = vmatprep.mubr.f32.mxu0 0.0
    %273 = vmatmul.mubr.f32.gmra.mxu0 %v155
    %v274 = vpop.f32.mrf.mxu0
    %v275 = vadd.f32 %v82, %v274
    %v276 = vpop.f32.mrf.mxu0
    %277 = vmatprep.mubr.f32.mxu0 0.0
    %278 = vmatmul.mubr.f32.gmra.mxu0 %v158
    %v279 = vpop.f32.mrf.mxu0
    %v280 = vadd.f32 %v87, %v279
    %v281 = vpop.f32.mrf.mxu0
    %282 = vmatprep.mubr.f32.mxu0 0.0
    %283 = vmatmul.mubr.f32.gmra.mxu0 %v161
    %v284 = vpop.f32.mrf.mxu0
    %v285 = vadd.f32 %v92, %v284
    %v286 = vpop.f32.mrf.mxu0
    %287 = vmatprep.mubr.f32.mxu0 0.0
    %288 = vmatmul.mubr.f32.gmra.mxu0 %v164
    %v289 = vpop.f32.mrf.mxu0
    %v290 = vadd.f32 %v97, %v289
    %v291 = vpop.f32.mrf.mxu0
    %292 = vmatprep.mubr.f32.mxu0 0.0
    %293 = vmatmul.mubr.f32.gmra.mxu0 %v167
    %v294 = vpop.f32.mrf.mxu0
    %v295 = vadd.f32 %v102, %v294
    %v296 = vpop.f32.mrf.mxu0
    %297 = vmatprep.mubr.f32.mxu0 0.0
    %298 = vmatmul.mubr.f32.gmra.mxu0 %v170
    %v299 = vpop.f32.mrf.mxu0
    %v300 = vadd.f32 %v107, %v299
    %v301 = vpop.f32.mrf.mxu0
    %302 = vmatprep.mubr.f32.mxu0 0.0
    %303 = vmatmul.mubr.f32.gmra.mxu0 %v173
    %v304 = vpop.f32.mrf.mxu0
    %v305 = vadd.f32 %v112, %v304
    %v306 = vpop.f32.mrf.mxu0
    %307 = vmatprep.mubr.f32.mxu0 0.0
    %308 = vmatmul.mubr.f32.gmra.mxu0 %v176
    %v309 = vpop.f32.mrf.mxu0
    %v310 = vadd.f32 %v117, %v309
    %v311 = vpop.f32.mrf.mxu0
    %312 = vmatprep.mubr.f32.mxu0 0.0
    %313 = vmatmul.mubr.f32.gmra.mxu0 %v179
    %v314 = vpop.f32.mrf.mxu0
    %v315 = vadd.f32 %v122, %v314
    %v316 = vpop.f32.mrf.mxu0
    %317 = vmatprep.mubr.f32.mxu0 0.0
    %318 = vmatmul.mubr.f32.gmra.mxu0 %v182
    %v319 = vpop.f32.mrf.mxu0
    %v320 = vadd.f32 %v127, %v319
    %v321 = vpop.f32.mrf.mxu0
    %322 = vmatprep.mubr.f32.mxu0 0.0
    %323 = vmatmul.mubr.f32.gmra.mxu0 %v185
    %v324 = vpop.f32.mrf.mxu0
    %v325 = vadd.f32 %v132, %v324
    %v326 = vpop.f32.mrf.mxu0
    %327 = vmatprep.mubr.f32.mxu0 0.0
    %328 = vmatmul.mubr.f32.gmra.mxu0 %v188
    %v329 = vpop.f32.mrf.mxu0
    %v330 = vadd.f32 %v137, %v329
    %v331 = vpop.f32.mrf.mxu0
    %332 = vmatprep.mubr.f32.mxu0 0.0
    %333 = vmatmul.mubr.f32.gmra.mxu0 %v191
    %v334 = vpop.f32.mrf.mxu0
    %v335 = vadd.f32 %v142, %v334
    %v336 = vpop.f32.mrf.mxu0
    %337 = vdwg.mxu0
    %v338 = vmax.f32 %v260, 0.0
    %v339 = vmax.f32 %v265, 0.0
    %v340 = vmax.f32 %v270, 0.0
    %v341 = vmax.f32 %v275, 0.0
    %v342 = vmax.f32 %v280, 0.0
    %v343 = vmax.f32 %v285, 0.0
    %v344 = vmax.f32 %v290, 0.0
    %v345 = vmax.f32 %v295, 0.0
    %v346 = vmax.f32 %v300, 0.0
    %v347 = vmax.f32 %v305, 0.0
    %v348 = vmax.f32 %v310, 0.0
    %v349 = vmax.f32 %v315, 0.0
    %v350 = vmax.f32 %v320, 0.0
    %v351 = vmax.f32 %v325, 0.0
    %v352 = vmax.f32 %v330, 0.0
    %v353 = vmax.f32 %v335, 0.0
    %v354 = vld [vmem:[%s3] sm:$0xff]
    %v355 = vld [vmem:[%s3 + $0x8] sm:$0xff]
    %v356 = vld [vmem:[%s3 + $0x10] sm:$0xff]
    %v357 = vld [vmem:[%s3 + $0x18] sm:$0xff]
    %v358 = vld [vmem:[%s3 + $0x20] sm:$0xff]
    %v359 = vld [vmem:[%s3 + $0x28] sm:$0xff]
    %v360 = vld [vmem:[%s3 + $0x30] sm:$0xff]
    %v361 = vld [vmem:[%s3 + $0x38] sm:$0xff]
    %v362 = vld [vmem:[%s4] sm:$0xff]
    %v363 = vld [vmem:[%s4 + $0x8] sm:$0xff]
    %v364 = vld [vmem:[%s4 + $0x10] sm:$0xff]
    %v365 = vld [vmem:[%s4 + $0x18] sm:$0xff]
    %v366 = vld [vmem:[%s4 + $0x20] sm:$0xff]
    %v367 = vld [vmem:[%s4 + $0x28] sm:$0xff]
    %v368 = vld [vmem:[%s4 + $0x30] sm:$0xff]
    %v369 = vld [vmem:[%s4 + $0x38] sm:$0xff]
    %371 = vset.pattern.permute.xlu0 0
    %372 = vperm.xlu0 %371, %v362
    %v373 = vpop.permute.xlu0 %372
    %376 = vset.pattern.permute.xlu0 0
    %377 = vperm.xlu0 %376, %v363
    %v378 = vpop.permute.xlu0 %377
    %381 = vset.pattern.permute.xlu0 0
    %382 = vperm.xlu0 %381, %v364
    %v383 = vpop.permute.xlu0 %382
    %386 = vset.pattern.permute.xlu0 0
    %387 = vperm.xlu0 %386, %v365
    %v388 = vpop.permute.xlu0 %387
    %391 = vset.pattern.permute.xlu0 0
    %392 = vperm.xlu0 %391, %v366
    %v393 = vpop.permute.xlu0 %392
    %396 = vset.pattern.permute.xlu0 0
    %397 = vperm.xlu0 %396, %v367
    %v398 = vpop.permute.xlu0 %397
    %401 = vset.pattern.permute.xlu0 0
    %402 = vperm.xlu0 %401, %v368
    %v403 = vpop.permute.xlu0 %402
    %406 = vset.pattern.permute.xlu0 0
    %407 = vperm.xlu0 %406, %v369
    %v408 = vpop.permute.xlu0 %407
    %410 = vmatprep.subr.mxu0 0.0
    %411 = vmatpush1.msra.mxu0 %v353
    %412 = vmatprep.subr.mxu0 0.0
    %413 = vmatpush1.msra.mxu0 %v352
    %414 = vmatprep.subr.mxu0 0.0
    %415 = vmatpush1.msra.mxu0 %v351
    %416 = vmatprep.subr.mxu0 0.0
    %417 = vmatpush1.msra.mxu0 %v350
    %418 = vmatprep.subr.mxu0 0.0
    %419 = vmatpush1.msra.mxu0 %v349
    %420 = vmatprep.subr.mxu0 0.0
    %421 = vmatpush1.msra.mxu0 %v348
    %422 = vmatprep.subr.mxu0 0.0
    %423 = vmatpush1.msra.mxu0 %v347
    %424 = vmatprep.subr.mxu0 0.0
    %425 = vmatpush1.msra.mxu0 %v346
    %426 = vmatprep.subr.mxu0 0.0
    %427 = vmatpush1.msra.mxu0 %v345
    %428 = vmatprep.subr.mxu0 0.0
    %429 = vmatpush1.msra.mxu0 %v344
    %430 = vmatprep.subr.mxu0 0.0
    %431 = vmatpush1.msra.mxu0 %v343
    %432 = vmatprep.subr.mxu0 0.0
    %433 = vmatpush1.msra.mxu0 %v342
    %434 = vmatprep.subr.mxu0 0.0
    %435 = vmatpush1.msra.mxu0 %v341
    %436 = vmatprep.subr.mxu0 0.0
    %437 = vmatpush1.msra.mxu0 %v340
    %438 = vmatprep.subr.mxu0 0.0
    %439 = vmatpush1.msra.mxu0 %v339
    %440 = vmatprep.subr.mxu0 0.0
    %441 = vmatpush1.msra.mxu0 %v338
    %442 = vmatprep.subr.mxu0 0.0
    %443 = vmatpush2.msra.mxu0 0.0
    %444 = vmatprep.subr.mxu0 0.0
    %445 = vmatpush2.msra.mxu0 0.0
    %446 = vmatprep.subr.mxu0 0.0
    %447 = vmatpush2.msra.mxu0 0.0
    %448 = vmatprep.subr.mxu0 0.0
    %449 = vmatpush2.msra.mxu0 0.0
    %450 = vmatprep.subr.mxu0 0.0
    %451 = vmatpush2.msra.mxu0 0.0
    %452 = vmatprep.subr.mxu0 0.0
    %453 = vmatpush2.msra.mxu0 0.0
    %454 = vmatprep.subr.mxu0 0.0
    %455 = vmatpush2.msra.mxu0 0.0
    %456 = vmatprep.subr.mxu0 0.0
    %457 = vmatpush2.msra.mxu0 0.0
    %458 = vmatprep.subr.mxu0 0.0
    %459 = vmatpush2.msra.mxu0 0.0
    %460 = vmatprep.subr.mxu0 0.0
    %461 = vmatpush2.msra.mxu0 0.0
    %462 = vmatprep.subr.mxu0 0.0
    %463 = vmatpush2.msra.mxu0 0.0
    %464 = vmatprep.subr.mxu0 0.0
    %465 = vmatpush2.msra.mxu0 0.0
    %466 = vmatprep.subr.mxu0 0.0
    %467 = vmatpush2.msra.mxu0 0.0
    %468 = vmatprep.subr.mxu0 0.0
    %469 = vmatpush2.msra.mxu0 0.0
    %470 = vmatprep.subr.mxu0 0.0
    %471 = vmatpush2.msra.mxu0 0.0
    %472 = vmatprep.subr.mxu0 0.0
    %473 = vmatpush2.msra.mxu0 0.0
    %474 = vmatprep.mubr.f32.mxu0 0.0
    %475 = vmatmul.mubr.f32.gmra.mxu0 %v354
    %v476 = vpop.f32.mrf.mxu0
    %v477 = vadd.f32 %v373, %v476
    %v478 = vpop.f32.mrf.mxu0
    %479 = vmatprep.mubr.f32.mxu0 0.0
    %480 = vmatmul.mubr.f32.gmra.mxu0 %v355
    %v481 = vpop.f32.mrf.mxu0
    %v482 = vadd.f32 %v378, %v481
    %v483 = vpop.f32.mrf.mxu0
    %484 = vmatprep.mubr.f32.mxu0 0.0
    %485 = vmatmul.mubr.f32.gmra.mxu0 %v356
    %v486 = vpop.f32.mrf.mxu0
    %v487 = vadd.f32 %v383, %v486
    %v488 = vpop.f32.mrf.mxu0
    %489 = vmatprep.mubr.f32.mxu0 0.0
    %490 = vmatmul.mubr.f32.gmra.mxu0 %v357
    %v491 = vpop.f32.mrf.mxu0
    %v492 = vadd.f32 %v388, %v491
    %v493 = vpop.f32.mrf.mxu0
    %494 = vmatprep.mubr.f32.mxu0 0.0
    %495 = vmatmul.mubr.f32.gmra.mxu0 %v358
    %v496 = vpop.f32.mrf.mxu0
    %v497 = vadd.f32 %v393, %v496
    %v498 = vpop.f32.mrf.mxu0
    %499 = vmatprep.mubr.f32.mxu0 0.0
    %500 = vmatmul.mubr.f32.gmra.mxu0 %v359
    %v501 = vpop.f32.mrf.mxu0
    %v502 = vadd.f32 %v398, %v501
    %v503 = vpop.f32.mrf.mxu0
    %504 = vmatprep.mubr.f32.mxu0 0.0
    %505 = vmatmul.mubr.f32.gmra.mxu0 %v360
    %v506 = vpop.f32.mrf.mxu0
    %v507 = vadd.f32 %v403, %v506
    %v508 = vpop.f32.mrf.mxu0
    %509 = vmatprep.mubr.f32.mxu0 0.0
    %510 = vmatmul.mubr.f32.gmra.mxu0 %v361
    %v511 = vpop.f32.mrf.mxu0
    %v512 = vadd.f32 %v408, %v511
    %v513 = vpop.f32.mrf.mxu0
    %514 = vdwg.mxu0
    %v515 = vmax.f32 %v477, 0.0
    %v516 = vmax.f32 %v482, 0.0
    %v517 = vmax.f32 %v487, 0.0
    %v518 = vmax.f32 %v492, 0.0
    %v519 = vmax.f32 %v497, 0.0
    %v520 = vmax.f32 %v502, 0.0
    %v521 = vmax.f32 %v507, 0.0
    %v522 = vmax.f32 %v512, 0.0
    %v523 = vld [vmem:[%s5] sm:$0xff]
    %v524 = vld [vmem:[%s5 + $0x8] sm:$0xff]
    %v525 = vld [vmem:[%s5 + $0x10] sm:$0xff]
    %v526 = vld [vmem:[%s5 + $0x18] sm:$0xff]
    %v527 = vld [vmem:[%s5 + $0x20] sm:$0xff]
    %v528 = vld [vmem:[%s5 + $0x28] sm:$0xff]
    %v529 = vld [vmem:[%s5 + $0x30] sm:$0xff]
    %v530 = vld [vmem:[%s5 + $0x38] sm:$0xff]
    %532 = vset.pattern.permute.xlu0 0
    %533 = vperm.xlu0 %532, %v523
    %v534 = vpop.permute.xlu0 %533
    %537 = vset.pattern.permute.xlu0 0
    %538 = vperm.xlu0 %537, %v524
    %v539 = vpop.permute.xlu0 %538
    %542 = vset.pattern.permute.xlu0 0
    %543 = vperm.xlu0 %542, %v525
    %v544 = vpop.permute.xlu0 %543
    %547 = vset.pattern.permute.xlu0 0
    %548 = vperm.xlu0 %547, %v526
    %v549 = vpop.permute.xlu0 %548
    %552 = vset.pattern.permute.xlu0 0
    %553 = vperm.xlu0 %552, %v527
    %v554 = vpop.permute.xlu0 %553
    %557 = vset.pattern.permute.xlu0 0
    %558 = vperm.xlu0 %557, %v528
    %v559 = vpop.permute.xlu0 %558
    %562 = vset.pattern.permute.xlu0 0
    %563 = vperm.xlu0 %562, %v529
    %v564 = vpop.permute.xlu0 %563
    %567 = vset.pattern.permute.xlu0 0
    %568 = vperm.xlu0 %567, %v530
    %v569 = vpop.permute.xlu0 %568
    %v571 = vmul.f32 %v515, %v534
    %v572 = vmul.f32 %v516, %v539
    %v573 = vmul.f32 %v517, %v544
    %v574 = vmul.f32 %v518, %v549
    %v575 = vmul.f32 %v519, %v554
    %v576 = vmul.f32 %v520, %v559
    %v577 = vmul.f32 %v521, %v564
    %v578 = vmul.f32 %v522, %v569
    %v579 = vadd.f32 %v571, %v572
    %v580 = vadd.f32 %v579, %v573
    %v581 = vadd.f32 %v580, %v574
    %v582 = vadd.f32 %v581, %v575
    %v583 = vadd.f32 %v582, %v576
    %v584 = vadd.f32 %v583, %v577
    %v585 = vadd.f32 %v584, %v578
    %v586 = vrot.slane %v585, 4
    %v587 = vadd.f32 %v585, %v586
    %v588 = vrot.slane %v587, 2
    %v589 = vadd.f32 %v587, %v588
    %v590 = vrot.slane %v589, 1
    %v591 = vadd.f32 %v589, %v590
    %s592 = sld [smem:[#allocation2]]
    %v593 = vstv %s592
    %v594 = vadd.f32 %v591, %v593
    %595 = vst [vmem:[#allocation3] sm:$0x1] %v594
    // Predicated region
    $region30: #{tpu_custom_call.1} parent=1 // pred_check
      _
    $region31: #{tpu_custom_call.1} parent=1 // pred_check_branch
      %597 = sbr.rel (0) target = $region33
    $region32: #{tpu_custom_call.1} parent=1 // pred_region
      %s599 = ssub.s32 16, 16
      %600 = vsyncadd [#allocation4], %s599
      %s602 = sshll.u32 [#allocation3], 4
      %s603 = int_to_ptr.vmem [resolvable:$true] %s602
      %605 = dma.vmem_to_hbm [thread:$0]  %s603, 16, %s7, [#allocation4]
    $region33: #{tpu_custom_call.1} parent=1 // pred_fallthru
      _
    // Predicated region
    $region34: #{tpu_custom_call.1} parent=1 // pred_check
      _
    $region35: #{tpu_custom_call.1} parent=1 // pred_check_branch
      %607 = sbr.rel (0) target = $region37
    $region36: #{tpu_custom_call.1} parent=1 // pred_region
      %608 = dma.done [#allocation4], 16
    $region37: #{tpu_custom_call.1} parent=1 // pred_fallthru
      _
    %609 = vsyncpa [#allocation4], 1

</llo_original>
